<compile_context>
chip_gen: v7x
topology: tpu7x:2x2x1
jax: 0.10.0
libtpu: 0.0.40
codegen_flags: <defaults>
</compile_context>

<pallas_src>
import jax
import jax.numpy as jnp
from jax.experimental import pallas as pl
from jax.experimental.pallas import tpu as pltpu


def _round_up(n, m):
    return (n + m - 1) // m * m


def mlp_kernel(x_ref,
               w1_ref, b1_ref,
               w2_ref, b2_ref,
               w3_ref, b3_ref,
               w4_ref, b4_ref,
               o_ref):
    """Fused 4-layer MLP forward for one batch tile of size tb.

    Per-tile shapes:
      x_ref : (tb, 2)   f32          w1: (2, 128)     b1: (1, 128)
      w2    : (128,128) f32/bf16     b2: (1, 128)
      w3    : (128,128) padded       b3: (1, 128) padded
      w4    : (128,128) col-0 only   b4: (1, 1)
      o_ref : (1, 1, tb) f32   (lane-dense output row)
    """
    x = x_ref[...]                                        # (tb, 2) f32
    w1 = w1_ref[...]                                      # (2, 128) f32

    # ---- Layer 1 (2 -> 128): two VPU FMAs instead of a tiny-K MXU pass. ----
    h1 = x[:, 0:1] * w1[0:1, :] + x[:, 1:2] * w1[1:2, :] + b1_ref[...]
    h1 = jnp.maximum(h1, 0.0)                             # (tb, 128) f32

    mxu_dtype = w2_ref.dtype                              # f32 or bf16 MXU operands

    # ---- Layer 2 (128 -> 128): MXU; bias + ReLU stay f32 on the VPU. -------
    h2 = jnp.dot(h1.astype(mxu_dtype), w2_ref[...],
                 preferred_element_type=jnp.float32)
    h2 = jnp.maximum(h2 + b2_ref[...], 0.0)               # (tb, 128) f32

    # ---- Layer 3 (128 -> 64, zero-padded to 128 lanes): MXU. ---------------
    h3 = jnp.dot(h2.astype(mxu_dtype), w3_ref[...],
                 preferred_element_type=jnp.float32)
    h3 = jnp.maximum(h3 + b3_ref[...], 0.0)               # (tb, 128); cols 64: are 0

    # ---- Layer 4 (-> 1): MXU matmul against the column-0-packed w4. --------
    # Only column 0 of p is meaningful; the 128x128 shape keeps the matmul
    # tile-native (no small-N lowering), and the MXU has plenty of slack.
    p = jnp.dot(h3.astype(mxu_dtype), w4_ref[...],
                preferred_element_type=jnp.float32)       # (tb, 128)
    y = p[:, 0:1] + b4_ref[...]                           # (tb, 1)
    # Single small relayout (batch sublanes -> lanes) for the lane-dense store.
    o_ref[...] = y[:, 0][None, None, :].astype(o_ref.dtype)    # (1, 1, tb)


def pack_params(params, *, use_bf16=False):
    """Repack (in,out)-layout params for the kernel.

    Pads layer 3 from 64 to 128 output columns (zeros), stores layer 4 as a
    (128, 128) matrix whose column 0 carries the weights (everything else
    zero), and optionally casts the MXU weight operands to bf16 (fast path on
    v5e/v6e/v7x alike; accumulation stays f32).
    """
    (w1, b1), (w2, b2), (w3, b3), (w4, b4) = params
    mxu_dtype = jnp.bfloat16 if use_bf16 else jnp.float32
    w3p = jnp.pad(w3, ((0, 0), (0, 128 - w3.shape[1])))               # (128,128)
    b3p = jnp.pad(b3, ((0, 0), (0, 128 - b3.shape[1])))               # (1,128)
    w4p = jnp.pad(w4, ((0, 128 - w4.shape[0]), (0, 128 - w4.shape[1])))  # (128,128)
    return (w1.astype(jnp.float32), b1.astype(jnp.float32),
            w2.astype(mxu_dtype),   b2.astype(jnp.float32),
            w3p.astype(mxu_dtype),  b3p.astype(jnp.float32),
            w4p.astype(mxu_dtype),  b4.astype(jnp.float32))


def mlp_forward(x, params, *, tile_b=4096, use_bf16=False):
    """x: (N, 2) float32 -> (N, 1) float32 (same semantics as the torch MLP)."""
    N = x.shape[0]
    w1, b1, w2, b2, w3, b3, w4, b4 = pack_params(params, use_bf16=use_bf16)

    # Lane-aligned batch tile, at most tile_b, no larger than the padded batch.
    n128 = _round_up(N, 128)
    tb = min(_round_up(max(tile_b, 128), 128), n128)
    # v7x megacore: keep the ("parallel",) grid >= 2 whenever the batch allows
    # it so both TensorCores get work (irrelevant but harmless on v5e/v6e).
    if n128 >= 2 * 128:
        tb = min(tb, _round_up((n128 + 1) // 2, 128))
    n_pad = _round_up(N, tb)
    grid = n_pad // tb
    if n_pad != N:
        x = jnp.pad(x, ((0, n_pad - N), (0, 0)))

    flops = n_pad * 2 * (2 * 128 + 128 * 128 + 128 * 64 + 64)
    bytes_accessed = int(x.size * x.dtype.itemsize + n_pad * 4 +
                         sum(int(a.size) * a.dtype.itemsize
                             for a in (w1, b1, w2, b2, w3, b3, w4, b4)))
    cost = pl.CostEstimate(flops=flops, transcendentals=0,
                           bytes_accessed=bytes_accessed)

    # Real per-tile footprint: x double buffer (lane-padded (tb,2) block
    # ~512 B/row x 2) + ~4 (tb,128) f32 temporaries (2048 B/row) + bf16 copies
    # + (1,1,tb) out double buffer + ~0.3 MiB weights + compiler scratch.
    # Capped at 40 MiB to keep headroom under v7x's 64 MiB physical VMEM.
    vmem_limit = int(min(40 << 20, max(8 << 20, tb * 4096 + (4 << 20))))

    full = lambda a: pl.BlockSpec(a.shape, lambda i: (0, 0))

    out3d = pl.pallas_call(
        mlp_kernel,
        out_shape=jax.ShapeDtypeStruct((grid, 1, tb), jnp.float32),
        grid=(grid,),
        in_specs=[
            pl.BlockSpec((tb, 2), lambda i: (i, 0)),        # x batch tile
            full(w1), full(b1),
            full(w2), full(b2),
            full(w3), full(b3),
            full(w4), full(b4),
        ],
        # Lane-dense output row; both trailing block dims satisfy the (8,128)
        # rule (second-to-last equals the full array dim of 1).
        out_specs=pl.BlockSpec((1, 1, tb), lambda i: (i, 0, 0)),
        compiler_params=pltpu.CompilerParams(
            dimension_semantics=("parallel",),
            vmem_limit_bytes=vmem_limit),
        cost_estimate=cost,
    )(x, w1, b1, w2, b2, w3, b3, w4, b4)

    return out3d.reshape(n_pad, 1)[:N]


def init_params(key):
    """Deterministic init mimicking torch.nn.Linear default
    (U[-1/sqrt(fan_in), 1/sqrt(fan_in)]); weights stored (in_features, out_features)."""
    dims = [(2, 128), (128, 128), (128, 64), (64, 1)]
    params = []
    for fan_in, fan_out in dims:
        key, kw, kb = jax.random.split(key, 3)
        bound = 1.0 / jnp.sqrt(fan_in)
        w = jax.random.uniform(kw, (fan_in, fan_out), jnp.float32, -bound, bound)
        b = jax.random.uniform(kb, (1, fan_out), jnp.float32, -bound, bound)
        params.append((w, b))
    return params


def mlp_ref(x, params):
    h = x
    for i, (w, b) in enumerate(params):
        h = h @ w + b
        if i < len(params) - 1:
            h = jnp.maximum(h, 0.0)
    return h


if __name__ == "__main__":
    key = jax.random.PRNGKey(0)
    key, kx1, kx2, kx3 = jax.random.split(key, 4)
    params = init_params(key)

    # 1) f32 path with multiple grid steps (N=512, tile_b=128 -> grid of 4).
    x1 = jax.random.normal(kx1, (512, 2), jnp.float32)
    out1 = jax.block_until_ready(mlp_forward(x1, params, tile_b=128))
    ref1 = mlp_ref(x1, params)
    assert out1.shape == (512, 1)
    assert jnp.allclose(out1, ref1, atol=1e-5, rtol=1e-5), "f32 grid>1 mismatch"

    # 2) f32 path, batch not a multiple of the tile (padding + grid>=2 cap).
    x2 = jax.random.normal(kx2, (200, 2), jnp.float32)
    out2 = jax.block_until_ready(mlp_forward(x2, params))
    ref2 = mlp_ref(x2, params)
    assert out2.shape == (200, 1)
    assert jnp.allclose(out2, ref2, atol=1e-5, rtol=1e-5), "f32 padded mismatch"

    # 3) bf16 MXU operands (fast path on v5e/v6e/v7x), f32 accumulation.
    x3 = jax.random.normal(kx3, (256, 2), jnp.float32)
    out3 = jax.block_until_ready(mlp_forward(x3, params, use_bf16=True))
    ref3 = mlp_ref(x3, params)
    assert out3.shape == (256, 1)
    assert jnp.allclose(out3, ref3, atol=5e-2, rtol=5e-2), "bf16 mismatch"

    print("KERNEL_OK")
</pallas_src>

<mosaic_0001>
module attributes {stable_mosaic.version = 11 : i64} {
  func.func @mlp_kernel(%arg0: i32, %arg1: memref<128x2xf32, #tpu.memory_space<vmem>>, %arg2: memref<2x128xf32, #tpu.memory_space<vmem>>, %arg3: memref<1x128xf32, #tpu.memory_space<vmem>>, %arg4: memref<128x128xf32, #tpu.memory_space<vmem>>, %arg5: memref<1x128xf32, #tpu.memory_space<vmem>>, %arg6: memref<128x128xf32, #tpu.memory_space<vmem>>, %arg7: memref<1x128xf32, #tpu.memory_space<vmem>>, %arg8: memref<128x128xf32, #tpu.memory_space<vmem>>, %arg9: memref<1x1xf32, #tpu.memory_space<vmem>>, %arg10: memref<1x1x128xf32, #tpu.memory_space<vmem>>) attributes {dimension_semantics = [#tpu.dimension_semantics<parallel>], iteration_bounds = array<i64: 4>, scalar_prefetch = 0 : i64, scratch_operands = 0 : i64, tpu.core_type = #tpu.core_type<tc>, window_params = [{transform_indices = @transform_0, window_bounds = array<i64: 128, 2>}, {pipeline_mode = #tpu.pipeline_mode<synchronous>, transform_indices = @transform_1, window_bounds = array<i64: 2, 128>}, {pipeline_mode = #tpu.pipeline_mode<synchronous>, transform_indices = @transform_2, window_bounds = array<i64: 1, 128>}, {pipeline_mode = #tpu.pipeline_mode<synchronous>, transform_indices = @transform_3, window_bounds = array<i64: 128, 128>}, {pipeline_mode = #tpu.pipeline_mode<synchronous>, transform_indices = @transform_4, window_bounds = array<i64: 1, 128>}, {pipeline_mode = #tpu.pipeline_mode<synchronous>, transform_indices = @transform_5, window_bounds = array<i64: 128, 128>}, {pipeline_mode = #tpu.pipeline_mode<synchronous>, transform_indices = @transform_6, window_bounds = array<i64: 1, 128>}, {pipeline_mode = #tpu.pipeline_mode<synchronous>, transform_indices = @transform_7, window_bounds = array<i64: 128, 128>}, {pipeline_mode = #tpu.pipeline_mode<synchronous>, transform_indices = @transform_8, window_bounds = array<i64: 1, 1>}, {transform_indices = @transform_9, window_bounds = array<i64: 1, 1, 128>}]} {
    %c0 = arith.constant 0 : index
    %c0_0 = arith.constant 0 : index
    %0 = vector.load %arg1[%c0, %c0_0] : memref<128x2xf32, #tpu.memory_space<vmem>>, vector<128x2xf32>
    %c0_1 = arith.constant 0 : index
    %c0_2 = arith.constant 0 : index
    %1 = vector.load %arg2[%c0_1, %c0_2] : memref<2x128xf32, #tpu.memory_space<vmem>>, vector<2x128xf32>
    %2 = vector.extract_strided_slice %0 {offsets = [0, 0], sizes = [128, 1], strides = [1, 1]} : vector<128x2xf32> to vector<128x1xf32>
    %3 = vector.extract_strided_slice %1 {offsets = [0, 0], sizes = [1, 128], strides = [1, 1]} : vector<2x128xf32> to vector<1x128xf32>
    %4 = vector.broadcast %2 : vector<128x1xf32> to vector<128x128xf32>
    %5 = vector.broadcast %3 : vector<1x128xf32> to vector<128x128xf32>
    %6 = arith.mulf %4, %5 : vector<128x128xf32>
    %7 = vector.extract_strided_slice %0 {offsets = [0, 1], sizes = [128, 1], strides = [1, 1]} : vector<128x2xf32> to vector<128x1xf32>
    %8 = vector.extract_strided_slice %1 {offsets = [1, 0], sizes = [1, 128], strides = [1, 1]} : vector<2x128xf32> to vector<1x128xf32>
    %9 = vector.broadcast %7 : vector<128x1xf32> to vector<128x128xf32>
    %10 = vector.broadcast %8 : vector<1x128xf32> to vector<128x128xf32>
    %11 = arith.mulf %9, %10 : vector<128x128xf32>
    %12 = arith.addf %6, %11 : vector<128x128xf32>
    %c0_3 = arith.constant 0 : index
    %c0_4 = arith.constant 0 : index
    %13 = vector.load %arg3[%c0_3, %c0_4] : memref<1x128xf32, #tpu.memory_space<vmem>>, vector<1x128xf32>
    %14 = vector.broadcast %13 : vector<1x128xf32> to vector<128x128xf32>
    %15 = arith.addf %12, %14 : vector<128x128xf32>
    %cst = arith.constant 0.000000e+00 : f32
    %16 = vector.broadcast %cst : f32 to vector<128x128xf32>
    %17 = arith.maximumf %15, %16 : vector<128x128xf32>
    %c0_5 = arith.constant 0 : index
    %c0_6 = arith.constant 0 : index
    %18 = vector.load %arg4[%c0_5, %c0_6] : memref<128x128xf32, #tpu.memory_space<vmem>>, vector<128x128xf32>
    %cst_7 = arith.constant dense<0.000000e+00> : vector<128x128xf32>
    %19 = tpu.matmul %17, %18, %cst_7 {dimension_numbers = #tpu.dot_dimension_numbers<[1], [0], [0], [1], [0, 0, 1, 1], [], []>} : vector<128x128xf32>, vector<128x128xf32>, vector<128x128xf32> -> vector<128x128xf32>
    %c0_8 = arith.constant 0 : index
    %c0_9 = arith.constant 0 : index
    %20 = vector.load %arg5[%c0_8, %c0_9] : memref<1x128xf32, #tpu.memory_space<vmem>>, vector<1x128xf32>
    %21 = vector.broadcast %20 : vector<1x128xf32> to vector<128x128xf32>
    %22 = arith.addf %19, %21 : vector<128x128xf32>
    %cst_10 = arith.constant 0.000000e+00 : f32
    %23 = vector.broadcast %cst_10 : f32 to vector<128x128xf32>
    %24 = arith.maximumf %22, %23 : vector<128x128xf32>
    %c0_11 = arith.constant 0 : index
    %c0_12 = arith.constant 0 : index
    %25 = vector.load %arg6[%c0_11, %c0_12] : memref<128x128xf32, #tpu.memory_space<vmem>>, vector<128x128xf32>
    %cst_13 = arith.constant dense<0.000000e+00> : vector<128x128xf32>
    %26 = tpu.matmul %24, %25, %cst_13 {dimension_numbers = #tpu.dot_dimension_numbers<[1], [0], [0], [1], [0, 0, 1, 1], [], []>} : vector<128x128xf32>, vector<128x128xf32>, vector<128x128xf32> -> vector<128x128xf32>
    %c0_14 = arith.constant 0 : index
    %c0_15 = arith.constant 0 : index
    %27 = vector.load %arg7[%c0_14, %c0_15] : memref<1x128xf32, #tpu.memory_space<vmem>>, vector<1x128xf32>
    %28 = vector.broadcast %27 : vector<1x128xf32> to vector<128x128xf32>
    %29 = arith.addf %26, %28 : vector<128x128xf32>
    %cst_16 = arith.constant 0.000000e+00 : f32
    %30 = vector.broadcast %cst_16 : f32 to vector<128x128xf32>
    %31 = arith.maximumf %29, %30 : vector<128x128xf32>
    %c0_17 = arith.constant 0 : index
    %c0_18 = arith.constant 0 : index
    %32 = vector.load %arg8[%c0_17, %c0_18] : memref<128x128xf32, #tpu.memory_space<vmem>>, vector<128x128xf32>
    %cst_19 = arith.constant dense<0.000000e+00> : vector<128x128xf32>
    %33 = tpu.matmul %31, %32, %cst_19 {dimension_numbers = #tpu.dot_dimension_numbers<[1], [0], [0], [1], [0, 0, 1, 1], [], []>} : vector<128x128xf32>, vector<128x128xf32>, vector<128x128xf32> -> vector<128x128xf32>
    %34 = vector.extract_strided_slice %33 {offsets = [0, 0], sizes = [128, 1], strides = [1, 1]} : vector<128x128xf32> to vector<128x1xf32>
    %c0_20 = arith.constant 0 : index
    %c0_21 = arith.constant 0 : index
    %35 = vector.load %arg9[%c0_20, %c0_21] : memref<1x1xf32, #tpu.memory_space<vmem>>, vector<1x1xf32>
    %36 = vector.broadcast %35 : vector<1x1xf32> to vector<128x1xf32>
    %37 = arith.addf %34, %36 : vector<128x1xf32>
    %38 = vector.shape_cast %37 : vector<128x1xf32> to vector<128xf32>
    %39 = vector.shape_cast %38 : vector<128xf32> to vector<1x1x128xf32>
    %c0_22 = arith.constant 0 : index
    %c0_23 = arith.constant 0 : index
    %c0_24 = arith.constant 0 : index
    %40 = vector.load %arg10[%c0_22, %c0_23, %c0_24] : memref<1x1x128xf32, #tpu.memory_space<vmem>>, vector<1x1x128xf32>
    tpu.vector_store %arg10[%c0_22, %c0_23, %c0_24], %39 {strides = array<i32>} : memref<1x1x128xf32, #tpu.memory_space<vmem>>, vector<1x1x128xf32>,
    return
  }
  func.func @transform_0(%arg0: i32) -> (i32, i32) {
    %c0_i32 = arith.constant 0 : i32
    %c0_i32_0 = arith.constant 0 : i32
    return %arg0, %c0_i32 : i32, i32
  }
  func.func @transform_1(%arg0: i32) -> (i32, i32) {
    %c0_i32 = arith.constant 0 : i32
    %c0_i32_0 = arith.constant 0 : i32
    %c0_i32_1 = arith.constant 0 : i32
    return %c0_i32, %c0_i32_0 : i32, i32
  }
  func.func @transform_2(%arg0: i32) -> (i32, i32) {
    %c0_i32 = arith.constant 0 : i32
    %c0_i32_0 = arith.constant 0 : i32
    %c0_i32_1 = arith.constant 0 : i32
    return %c0_i32, %c0_i32_0 : i32, i32
  }
  func.func @transform_3(%arg0: i32) -> (i32, i32) {
    %c0_i32 = arith.constant 0 : i32
    %c0_i32_0 = arith.constant 0 : i32
    %c0_i32_1 = arith.constant 0 : i32
    return %c0_i32, %c0_i32_0 : i32, i32
  }
  func.func @transform_4(%arg0: i32) -> (i32, i32) {
    %c0_i32 = arith.constant 0 : i32
    %c0_i32_0 = arith.constant 0 : i32
    %c0_i32_1 = arith.constant 0 : i32
    return %c0_i32, %c0_i32_0 : i32, i32
  }
  func.func @transform_5(%arg0: i32) -> (i32, i32) {
    %c0_i32 = arith.constant 0 : i32
    %c0_i32_0 = arith.constant 0 : i32
    %c0_i32_1 = arith.constant 0 : i32
    return %c0_i32, %c0_i32_0 : i32, i32
  }
  func.func @transform_6(%arg0: i32) -> (i32, i32) {
    %c0_i32 = arith.constant 0 : i32
    %c0_i32_0 = arith.constant 0 : i32
    %c0_i32_1 = arith.constant 0 : i32
    return %c0_i32, %c0_i32_0 : i32, i32
  }
  func.func @transform_7(%arg0: i32) -> (i32, i32) {
    %c0_i32 = arith.constant 0 : i32
    %c0_i32_0 = arith.constant 0 : i32
    %c0_i32_1 = arith.constant 0 : i32
    return %c0_i32, %c0_i32_0 : i32, i32
  }
  func.func @transform_8(%arg0: i32) -> (i32, i32) {
    %c0_i32 = arith.constant 0 : i32
    %c0_i32_0 = arith.constant 0 : i32
    %c0_i32_1 = arith.constant 0 : i32
    return %c0_i32, %c0_i32_0 : i32, i32
  }
  func.func @transform_9(%arg0: i32) -> (i32, i32, i32) {
    %c0_i32 = arith.constant 0 : i32
    %c0_i32_0 = arith.constant 0 : i32
    %c0_i32_1 = arith.constant 0 : i32
    return %arg0, %c0_i32, %c0_i32_0 : i32, i32, i32
  }
}

</mosaic_0001>

<llo_original>
// kernel: tpu_custom_call.1
$region0: #{tpu_custom_call.1}
  #allocation0 [shape = 'u32[]', space=smem, size = 0x4, offset = 0x4, fixed_abs, tag = 'smem constant byte address 0x4 - core index']
  #allocation1 [shape = 'u32[144,128]{1,0:T(1,128)}', space=vmem, size = 0x12000, scoped, tag = 'internal scratch']
  #allocation2 [shape = 'f32[1,1]{1,0:T(1,128)S(1)}', space=vmem, size = 0x200, scoped, tag = 'scoped memory for tpu_custom_call.1']
  %s0 = inlined_call_operand.vmem [shape: f32[512,2], index: 0, kind: input, shape index: {}]
  %s1 = inlined_call_operand.vmem [shape: f32[2,128], index: 1, kind: input, shape index: {}]
  %s2 = inlined_call_operand.vmem [shape: f32[1,128], index: 2, kind: input, shape index: {}]
  %s3 = inlined_call_operand.vmem [shape: f32[128,128], index: 3, kind: input, shape index: {}]
  %s4 = inlined_call_operand.vmem [shape: f32[1,128], index: 4, kind: input, shape index: {}]
  %s5 = inlined_call_operand.vmem [shape: f32[128,128], index: 5, kind: input, shape index: {}]
  %s6 = inlined_call_operand.vmem [shape: f32[1,128], index: 6, kind: input, shape index: {}]
  %s7 = inlined_call_operand.vmem [shape: f32[128,128], index: 7, kind: input, shape index: {}]
  %s8 = inlined_call_operand.<no memory space> [shape: f32[1,1], index: 8, kind: input, shape index: {}]
  %s9 = inlined_call_operand.hbm [shape: f32[4,1,128], index: 9, kind: output, shape index: {}]
  %s10 = sld [smem:[#allocation0]]
  $region69: #{tpu_custom_call.1} parent=0
    _
  %s12 = ssub.s32 1, %s10
  %s13 = scalar_select 0, %s12, %s10
  %v14 = vstv %s8
  %15 = vst [vmem:[#allocation2] sm:$0x1] %v14
  $region1: #{tpu_custom_call.1} parent=0
    #allocation3 [shape = 'u8[1024]{0}', space=vmem, size = 0x400, scoped, tag = 'output window, operand 0']
    #allocation4 [shape = 's32[2]{0}', space=sflag, size = 0x8, scoped, tag = 'scoped memory for tpu_custom_call.1']
    %16 = vsyncpa [#allocation4], 0
    %s17 = scalar_lea.sflag [#allocation4], 1
    %18 = vsyncpa %s17, 0
    loop: start=0, step=1, limit=6
    $region2: #{tpu_custom_call.1} parent=1 // loop_pre_header
      _
    $region3: #{tpu_custom_call.1} parent=1 // loop_header
      %s20 = sphi 0, %s24
      %p21 = scmp.ge.s32.totalorder %s20, 6
      %s30 = sphi 0, %s32
      %s33 = sphi 0, %s30
      %s34 = sphi 0, %s33
      %s50 = sphi 0, %s34
      %s54 = sphi 0, %s54
      %s56 = sphi 0, %s54
      %s57 = sphi 0, %s56
      %s71 = sphi 0, %s57
      %s75 = sphi 0, %s75
      %s77 = sphi 0, %s75
      %s78 = sphi 0, %s77
      %s92 = sphi 0, %s78
      %s96 = sphi 0, %s96
      %s98 = sphi 0, %s96
      %s99 = sphi 0, %s98
      %s113 = sphi 0, %s99
      %s117 = sphi 0, %s117
      %s119 = sphi 0, %s117
      %s120 = sphi 0, %s119
      %s134 = sphi 0, %s120
      %s138 = sphi 0, %s138
      %s140 = sphi 0, %s138
      %s141 = sphi 0, %s140
      %s155 = sphi 0, %s141
      %s159 = sphi 0, %s159
      %s161 = sphi 0, %s159
      %s162 = sphi 0, %s161
      %s176 = sphi 0, %s162
      %s180 = sphi 0, %s180
      %s182 = sphi 0, %s180
      %s183 = sphi 0, %s182
      %s197 = sphi 0, %s183
      %s201 = sphi 0, %s201
      %s203 = sphi 0, %s201
      %s204 = sphi 0, %s203
      %s218 = sphi 0, %s204
      %s224 = sphi 0, %s226
      %s227 = sphi 0, %s224
      %s228 = sphi 0, %s227
      %s244 = sphi 0, %s228
    $region4: #{tpu_custom_call.1} parent=1 // loop_header_branch
      %23 = sbr.rel (%p21) target = $region8
    $region5: #{tpu_custom_call.1} parent=1 // loop_body
      %s25 = ssub.s32 %s20, 1
      %s26 = ssub.s32 %s20, 2
      %s27 = sadd.s32 %s20, 1
      %s28 = ssub.s32 %s20, %s27
      %p29 = scmp.eq.s32.totalorder %s28, 0
      %s31 = sadd.s32 %s30, 1
      %s32 = scalar_select %p29, %s30, %s31
      %p35 = pneg %p29
      %p36 = scmp.eq.s32.totalorder %s20, 3
      %p37 = por %p35, %p36
      %p38 = scmp.ne.s32.totalorder %s30, %s33
      %p39 = scmp.eq.s32.totalorder %s20, 0
      %p40 = por %p38, %p39
      %p41 = scmp.ne.s32.totalorder %s30, %s33
      %p42 = scmp.eq.s32.totalorder %s25, 3
      %p43 = por %p41, %p42
      %p44 = scmp.ne.s32.totalorder %s33, %s34
      %p45 = scmp.eq.s32.totalorder %s25, 0
      %p46 = por %p44, %p45
      %p47 = scmp.ne.s32.totalorder %s33, %s34
      %p48 = scmp.eq.s32.totalorder %s26, 3
      %p49 = por %p47, %p48
      %p51 = scmp.ne.s32.totalorder %s34, %s50
      %p52 = scmp.eq.s32.totalorder %s26, 0
      %p53 = por %p51, %p52
      %s55 = sadd.s32 %s54, 1
      %p58 = scmp.eq.s32.totalorder %s20, 3
      %p59 = scmp.ne.s32.totalorder %s54, %s56
      %p60 = scmp.eq.s32.totalorder %s20, 0
      %p61 = por %p59, %p60
      %p62 = scmp.ne.s32.totalorder %s54, %s56
      %p63 = scmp.eq.s32.totalorder %s25, 3
      %p64 = por %p62, %p63
      %p65 = scmp.ne.s32.totalorder %s56, %s57
      %p66 = scmp.eq.s32.totalorder %s25, 0
      %p67 = por %p65, %p66
      %p68 = scmp.ne.s32.totalorder %s56, %s57
      %p69 = scmp.eq.s32.totalorder %s26, 3
      %p70 = por %p68, %p69
      %p72 = scmp.ne.s32.totalorder %s57, %s71
      %p73 = scmp.eq.s32.totalorder %s26, 0
      %p74 = por %p72, %p73
      %s76 = sadd.s32 %s75, 1
      %p79 = scmp.eq.s32.totalorder %s20, 3
      %p80 = scmp.ne.s32.totalorder %s75, %s77
      %p81 = scmp.eq.s32.totalorder %s20, 0
      %p82 = por %p80, %p81
      %p83 = scmp.ne.s32.totalorder %s75, %s77
      %p84 = scmp.eq.s32.totalorder %s25, 3
      %p85 = por %p83, %p84
      %p86 = scmp.ne.s32.totalorder %s77, %s78
      %p87 = scmp.eq.s32.totalorder %s25, 0
      %p88 = por %p86, %p87
      %p89 = scmp.ne.s32.totalorder %s77, %s78
      %p90 = scmp.eq.s32.totalorder %s26, 3
      %p91 = por %p89, %p90
      %p93 = scmp.ne.s32.totalorder %s78, %s92
      %p94 = scmp.eq.s32.totalorder %s26, 0
      %p95 = por %p93, %p94
      %s97 = sadd.s32 %s96, 1
      %p100 = scmp.eq.s32.totalorder %s20, 3
      %p101 = scmp.ne.s32.totalorder %s96, %s98
      %p102 = scmp.eq.s32.totalorder %s20, 0
      %p103 = por %p101, %p102
      %p104 = scmp.ne.s32.totalorder %s96, %s98
      %p105 = scmp.eq.s32.totalorder %s25, 3
      %p106 = por %p104, %p105
      %p107 = scmp.ne.s32.totalorder %s98, %s99
      %p108 = scmp.eq.s32.totalorder %s25, 0
      %p109 = por %p107, %p108
      %p110 = scmp.ne.s32.totalorder %s98, %s99
      %p111 = scmp.eq.s32.totalorder %s26, 3
      %p112 = por %p110, %p111
      %p114 = scmp.ne.s32.totalorder %s99, %s113
      %p115 = scmp.eq.s32.totalorder %s26, 0
      %p116 = por %p114, %p115
      %s118 = sadd.s32 %s117, 1
      %p121 = scmp.eq.s32.totalorder %s20, 3
      %p122 = scmp.ne.s32.totalorder %s117, %s119
      %p123 = scmp.eq.s32.totalorder %s20, 0
      %p124 = por %p122, %p123
      %p125 = scmp.ne.s32.totalorder %s117, %s119
      %p126 = scmp.eq.s32.totalorder %s25, 3
      %p127 = por %p125, %p126
      %p128 = scmp.ne.s32.totalorder %s119, %s120
      %p129 = scmp.eq.s32.totalorder %s25, 0
      %p130 = por %p128, %p129
      %p131 = scmp.ne.s32.totalorder %s119, %s120
      %p132 = scmp.eq.s32.totalorder %s26, 3
      %p133 = por %p131, %p132
      %p135 = scmp.ne.s32.totalorder %s120, %s134
      %p136 = scmp.eq.s32.totalorder %s26, 0
      %p137 = por %p135, %p136
      %s139 = sadd.s32 %s138, 1
      %p142 = scmp.eq.s32.totalorder %s20, 3
      %p143 = scmp.ne.s32.totalorder %s138, %s140
      %p144 = scmp.eq.s32.totalorder %s20, 0
      %p145 = por %p143, %p144
      %p146 = scmp.ne.s32.totalorder %s138, %s140
      %p147 = scmp.eq.s32.totalorder %s25, 3
      %p148 = por %p146, %p147
      %p149 = scmp.ne.s32.totalorder %s140, %s141
      %p150 = scmp.eq.s32.totalorder %s25, 0
      %p151 = por %p149, %p150
      %p152 = scmp.ne.s32.totalorder %s140, %s141
      %p153 = scmp.eq.s32.totalorder %s26, 3
      %p154 = por %p152, %p153
      %p156 = scmp.ne.s32.totalorder %s141, %s155
      %p157 = scmp.eq.s32.totalorder %s26, 0
      %p158 = por %p156, %p157
      %s160 = sadd.s32 %s159, 1
      %p163 = scmp.eq.s32.totalorder %s20, 3
      %p164 = scmp.ne.s32.totalorder %s159, %s161
      %p165 = scmp.eq.s32.totalorder %s20, 0
      %p166 = por %p164, %p165
      %p167 = scmp.ne.s32.totalorder %s159, %s161
      %p168 = scmp.eq.s32.totalorder %s25, 3
      %p169 = por %p167, %p168
      %p170 = scmp.ne.s32.totalorder %s161, %s162
      %p171 = scmp.eq.s32.totalorder %s25, 0
      %p172 = por %p170, %p171
      %p173 = scmp.ne.s32.totalorder %s161, %s162
      %p174 = scmp.eq.s32.totalorder %s26, 3
      %p175 = por %p173, %p174
      %p177 = scmp.ne.s32.totalorder %s162, %s176
      %p178 = scmp.eq.s32.totalorder %s26, 0
      %p179 = por %p177, %p178
      %s181 = sadd.s32 %s180, 1
      %p184 = scmp.eq.s32.totalorder %s20, 3
      %p185 = scmp.ne.s32.totalorder %s180, %s182
      %p186 = scmp.eq.s32.totalorder %s20, 0
      %p187 = por %p185, %p186
      %p188 = scmp.ne.s32.totalorder %s180, %s182
      %p189 = scmp.eq.s32.totalorder %s25, 3
      %p190 = por %p188, %p189
      %p191 = scmp.ne.s32.totalorder %s182, %s183
      %p192 = scmp.eq.s32.totalorder %s25, 0
      %p193 = por %p191, %p192
      %p194 = scmp.ne.s32.totalorder %s182, %s183
      %p195 = scmp.eq.s32.totalorder %s26, 3
      %p196 = por %p194, %p195
      %p198 = scmp.ne.s32.totalorder %s183, %s197
      %p199 = scmp.eq.s32.totalorder %s26, 0
      %p200 = por %p198, %p199
      %s202 = sadd.s32 %s201, 1
      %p205 = scmp.eq.s32.totalorder %s20, 3
      %p206 = scmp.ne.s32.totalorder %s201, %s203
      %p207 = scmp.eq.s32.totalorder %s20, 0
      %p208 = por %p206, %p207
      %p209 = scmp.ne.s32.totalorder %s201, %s203
      %p210 = scmp.eq.s32.totalorder %s25, 3
      %p211 = por %p209, %p210
      %p212 = scmp.ne.s32.totalorder %s203, %s204
      %p213 = scmp.eq.s32.totalorder %s25, 0
      %p214 = por %p212, %p213
      %p215 = scmp.ne.s32.totalorder %s203, %s204
      %p216 = scmp.eq.s32.totalorder %s26, 3
      %p217 = por %p215, %p216
      %p219 = scmp.ne.s32.totalorder %s204, %s218
      %p220 = scmp.eq.s32.totalorder %s26, 0
      %p221 = por %p219, %p220
      %s222 = ssub.s32 %s20, %s27
      %p223 = scmp.eq.s32.totalorder %s222, 0
      %s225 = sadd.s32 %s224, 1
      %s226 = scalar_select %p223, %s224, %s225
      %p229 = pneg %p223
      %p230 = scmp.eq.s32.totalorder %s20, 3
      %p231 = por %p229, %p230
      %p232 = scmp.ne.s32.totalorder %s224, %s227
      %p233 = scmp.eq.s32.totalorder %s20, 0
      %p234 = por %p232, %p233
      %p235 = scmp.ne.s32.totalorder %s224, %s227
      %p236 = scmp.eq.s32.totalorder %s25, 3
      %p237 = por %p235, %p236
      %p238 = scmp.ne.s32.totalorder %s227, %s228
      %p239 = scmp.eq.s32.totalorder %s25, 0
      %p240 = por %p238, %p239
      %p241 = scmp.ne.s32.totalorder %s227, %s228
      %p242 = scmp.eq.s32.totalorder %s26, 3
      %p243 = por %p241, %p242
      %p245 = scmp.ne.s32.totalorder %s228, %s244
      %p246 = scmp.eq.s32.totalorder %s26, 0
      %p247 = por %p245, %p246
      %p248 = scmp.le.s32.totalorder 1, %s20
      %p249 = scmp.lt.s32.totalorder %s20, 5
      %p250 = pnand %p248, %p249
      %p251 = pneg %p250
      // Predicated region
      $region9: #{tpu_custom_call.1} parent=5 // pred_check
        _
      $region10: #{tpu_custom_call.1} parent=5 // pred_check_branch
        %253 = sbr.rel (%p250) target = $region12
      $region11: #{tpu_custom_call.1} parent=5 // pred_region
        %s254 = ssub.s32 %s20, 1
        // Predicated region
        $region13: #{tpu_custom_call.1} parent=11 // pred_check
          %p255 = pneg %p67
        $region14: #{tpu_custom_call.1} parent=11 // pred_check_branch
          %257 = sbr.rel (%p255) target = $region16
        $region15: #{tpu_custom_call.1} parent=11 // pred_region
          _
        $region16: #{tpu_custom_call.1} parent=11 // pred_fallthru
          _
        // Predicated region
        $region17: #{tpu_custom_call.1} parent=11 // pred_check
          %p258 = pneg %p88
        $region18: #{tpu_custom_call.1} parent=11 // pred_check_branch
          %260 = sbr.rel (%p258) target = $region20
        $region19: #{tpu_custom_call.1} parent=11 // pred_region
          _
        $region20: #{tpu_custom_call.1} parent=11 // pred_fallthru
          _
        // Predicated region
        $region21: #{tpu_custom_call.1} parent=11 // pred_check
          %p261 = pneg %p109
        $region22: #{tpu_custom_call.1} parent=11 // pred_check_branch
          %263 = sbr.rel (%p261) target = $region24
        $region23: #{tpu_custom_call.1} parent=11 // pred_region
          _
        $region24: #{tpu_custom_call.1} parent=11 // pred_fallthru
          _
        // Predicated region
        $region25: #{tpu_custom_call.1} parent=11 // pred_check
          %p264 = pneg %p130
        $region26: #{tpu_custom_call.1} parent=11 // pred_check_branch
          %266 = sbr.rel (%p264) target = $region28
        $region27: #{tpu_custom_call.1} parent=11 // pred_region
          _
        $region28: #{tpu_custom_call.1} parent=11 // pred_fallthru
          _
        // Predicated region
        $region29: #{tpu_custom_call.1} parent=11 // pred_check
          %p267 = pneg %p151
        $region30: #{tpu_custom_call.1} parent=11 // pred_check_branch
          %269 = sbr.rel (%p267) target = $region32
        $region31: #{tpu_custom_call.1} parent=11 // pred_region
          _
        $region32: #{tpu_custom_call.1} parent=11 // pred_fallthru
          _
        // Predicated region
        $region33: #{tpu_custom_call.1} parent=11 // pred_check
          %p270 = pneg %p172
        $region34: #{tpu_custom_call.1} parent=11 // pred_check_branch
          %272 = sbr.rel (%p270) target = $region36
        $region35: #{tpu_custom_call.1} parent=11 // pred_region
          _
        $region36: #{tpu_custom_call.1} parent=11 // pred_fallthru
          _
        // Predicated region
        $region37: #{tpu_custom_call.1} parent=11 // pred_check
          %p273 = pneg %p193
        $region38: #{tpu_custom_call.1} parent=11 // pred_check_branch
          %275 = sbr.rel (%p273) target = $region40
        $region39: #{tpu_custom_call.1} parent=11 // pred_region
          _
        $region40: #{tpu_custom_call.1} parent=11 // pred_fallthru
          _
        // Predicated region
        $region41: #{tpu_custom_call.1} parent=11 // pred_check
          %p276 = pneg %p214
        $region42: #{tpu_custom_call.1} parent=11 // pred_check_branch
          %278 = sbr.rel (%p276) target = $region44
        $region43: #{tpu_custom_call.1} parent=11 // pred_region
          _
        $region44: #{tpu_custom_call.1} parent=11 // pred_fallthru
          _
      $region12: #{tpu_custom_call.1} parent=5 // pred_fallthru
        _
      %p279 = scmp.lt.s32.totalorder %s20, 4
      // Predicated region
      $region45: #{tpu_custom_call.1} parent=5 // pred_check
        %p280 = pneg %p279
      $region46: #{tpu_custom_call.1} parent=5 // pred_check_branch
        %282 = sbr.rel (%p280) target = $region48
      $region47: #{tpu_custom_call.1} parent=5 // pred_region
        // Predicated region
        $region49: #{tpu_custom_call.1} parent=47 // pred_check
          %p283 = pneg %p40
        $region50: #{tpu_custom_call.1} parent=47 // pred_check_branch
          %285 = sbr.rel (%p283) target = $region52
        $region51: #{tpu_custom_call.1} parent=47 // pred_region
          %s286 = smul.u32 16, %s20
          %p287 = scmp.lt.s32.totalorder %s286, 63
          %s288 = scalar_select %p287, %s286, 63
          %s289 = smul.addr %s288, 8
          %s290 = scalar_lea.vmem %s0, %s289
          %s291 = smul.u32 16, %s20
        $region52: #{tpu_custom_call.1} parent=47 // pred_fallthru
          _
      $region48: #{tpu_custom_call.1} parent=5 // pred_fallthru
        _
      %p292 = scmp.le.s32.totalorder 1, %s20
      %p293 = scmp.lt.s32.totalorder %s20, 5
      %p294 = pnand %p292, %p293
      %p295 = pneg %p294
      // Predicated region
      $region53: #{tpu_custom_call.1} parent=5 // pred_check
        _
      $region54: #{tpu_custom_call.1} parent=5 // pred_check_branch
        %297 = sbr.rel (%p294) target = $region56
      $region55: #{tpu_custom_call.1} parent=5 // pred_region
        %s298 = ssub.s32 %s20, 1
        %s299 = smul.u32 16, %s25
        %p300 = scmp.lt.s32.totalorder %s299, 63
        %s301 = scalar_select %p300, %s299, 63
        %s302 = smul.addr %s301, 8
        %s303 = scalar_lea.vmem %s0, %s302
        %p304 = pneg %p46
        %p305 = pneg %p43
        %p306 = pneg %p67
        %p307 = pneg %p64
        %p308 = pneg %p88
        %p309 = pneg %p85
        %p310 = pneg %p109
        %p311 = pneg %p106
        %p312 = pneg %p130
        %p313 = pneg %p127
        %p314 = pneg %p151
        %p315 = pneg %p148
        %p316 = pneg %p172
        %p317 = pneg %p169
        %p318 = pneg %p193
        %p319 = pneg %p190
        %p320 = pneg %p214
        %p321 = pneg %p211
        %p322 = pneg %p240
        %p323 = pneg %p237
        %s324 = sand.u32 %s227, 1
        %s325 = scalar_lea.sflag [#allocation4], %s324
        %s326 = sand.u32 %s227, 1
        %s327 = scalar_lea.vmem [#allocation3], %s326
        %s328 = smul.u32 16, %s25
        %p329 = scmp.lt.s32.totalorder %s328, 63
        %s330 = scalar_select %p329, %s328, 63
        %s331 = smul.addr %s330, 8
        %s332 = scalar_lea.vmem %s0, %s331
        %s333 = smul.u32 16, %s25
        %v334 = vld [vmem:[%s332] sm:$0xff]
        %v335 = vld [vmem:[%s332 + $0x8] sm:$0xff]
        %v336 = vld [vmem:[%s332 + $0x10] sm:$0xff]
        %v337 = vld [vmem:[%s332 + $0x18] sm:$0xff]
        %v338 = vld [vmem:[%s332 + $0x20] sm:$0xff]
        %v339 = vld [vmem:[%s332 + $0x28] sm:$0xff]
        %v340 = vld [vmem:[%s332 + $0x30] sm:$0xff]
        %v341 = vld [vmem:[%s332 + $0x38] sm:$0xff]
        %v342 = vld [vmem:[%s332 + $0x40] sm:$0xff]
        %v343 = vld [vmem:[%s332 + $0x48] sm:$0xff]
        %v344 = vld [vmem:[%s332 + $0x50] sm:$0xff]
        %v345 = vld [vmem:[%s332 + $0x58] sm:$0xff]
        %v346 = vld [vmem:[%s332 + $0x60] sm:$0xff]
        %v347 = vld [vmem:[%s332 + $0x68] sm:$0xff]
        %v348 = vld [vmem:[%s332 + $0x70] sm:$0xff]
        %v349 = vld [vmem:[%s332 + $0x78] sm:$0xff]
        %v350 = vld [vmem:[%s1] sm:$0x3]
        %352 = vset.pattern.permute.xlu0 0
        %353 = vperm.xlu0 %352, %v334
        %v354 = vpop.permute.xlu0 %353
        %357 = vset.pattern.permute.xlu0 0
        %358 = vperm.xlu0 %357, %v335
        %v359 = vpop.permute.xlu0 %358
        %362 = vset.pattern.permute.xlu0 0
        %363 = vperm.xlu0 %362, %v336
        %v364 = vpop.permute.xlu0 %363
        %367 = vset.pattern.permute.xlu0 0
        %368 = vperm.xlu0 %367, %v337
        %v369 = vpop.permute.xlu0 %368
        %372 = vset.pattern.permute.xlu0 0
        %373 = vperm.xlu0 %372, %v338
        %v374 = vpop.permute.xlu0 %373
        %377 = vset.pattern.permute.xlu0 0
        %378 = vperm.xlu0 %377, %v339
        %v379 = vpop.permute.xlu0 %378
        %382 = vset.pattern.permute.xlu0 0
        %383 = vperm.xlu0 %382, %v340
        %v384 = vpop.permute.xlu0 %383
        %387 = vset.pattern.permute.xlu0 0
        %388 = vperm.xlu0 %387, %v341
        %v389 = vpop.permute.xlu0 %388
        %392 = vset.pattern.permute.xlu0 0
        %393 = vperm.xlu0 %392, %v342
        %v394 = vpop.permute.xlu0 %393
        %397 = vset.pattern.permute.xlu0 0
        %398 = vperm.xlu0 %397, %v343
        %v399 = vpop.permute.xlu0 %398
        %402 = vset.pattern.permute.xlu0 0
        %403 = vperm.xlu0 %402, %v344
        %v404 = vpop.permute.xlu0 %403
        %407 = vset.pattern.permute.xlu0 0
        %408 = vperm.xlu0 %407, %v345
        %v409 = vpop.permute.xlu0 %408
        %412 = vset.pattern.permute.xlu0 0
        %413 = vperm.xlu0 %412, %v346
        %v414 = vpop.permute.xlu0 %413
        %417 = vset.pattern.permute.xlu0 0
        %418 = vperm.xlu0 %417, %v347
        %v419 = vpop.permute.xlu0 %418
        %422 = vset.pattern.permute.xlu0 0
        %423 = vperm.xlu0 %422, %v348
        %v424 = vpop.permute.xlu0 %423
        %427 = vset.pattern.permute.xlu0 0
        %428 = vperm.xlu0 %427, %v349
        %v429 = vpop.permute.xlu0 %428
        %v431 = vlaneseq
        %v432 = vshrl.u32 %v431, 7
        %v433 = vsub.s32 0, %v432
        %v434 = vrot.slane %v350, %v433
        %v435 = vmul.f32 %v354, %v434
        %v436 = vmul.f32 %v359, %v434
        %v437 = vmul.f32 %v364, %v434
        %v438 = vmul.f32 %v369, %v434
        %v439 = vmul.f32 %v374, %v434
        %v440 = vmul.f32 %v379, %v434
        %v441 = vmul.f32 %v384, %v434
        %v442 = vmul.f32 %v389, %v434
        %v443 = vmul.f32 %v394, %v434
        %v444 = vmul.f32 %v399, %v434
        %v445 = vmul.f32 %v404, %v434
        %v446 = vmul.f32 %v409, %v434
        %v447 = vmul.f32 %v414, %v434
        %v448 = vmul.f32 %v419, %v434
        %v449 = vmul.f32 %v424, %v434
        %v450 = vmul.f32 %v429, %v434
        %451 = vset.pattern.permute.xlu0 1
        %452 = vperm.xlu0 %451, %v334
        %v453 = vpop.permute.xlu0 %452
        %455 = vset.pattern.permute.xlu0 1
        %456 = vperm.xlu0 %455, %v335
        %v457 = vpop.permute.xlu0 %456
        %459 = vset.pattern.permute.xlu0 1
        %460 = vperm.xlu0 %459, %v336
        %v461 = vpop.permute.xlu0 %460
        %463 = vset.pattern.permute.xlu0 1
        %464 = vperm.xlu0 %463, %v337
        %v465 = vpop.permute.xlu0 %464
        %467 = vset.pattern.permute.xlu0 1
        %468 = vperm.xlu0 %467, %v338
        %v469 = vpop.permute.xlu0 %468
        %471 = vset.pattern.permute.xlu0 1
        %472 = vperm.xlu0 %471, %v339
        %v473 = vpop.permute.xlu0 %472
        %475 = vset.pattern.permute.xlu0 1
        %476 = vperm.xlu0 %475, %v340
        %v477 = vpop.permute.xlu0 %476
        %479 = vset.pattern.permute.xlu0 1
        %480 = vperm.xlu0 %479, %v341
        %v481 = vpop.permute.xlu0 %480
        %483 = vset.pattern.permute.xlu0 1
        %484 = vperm.xlu0 %483, %v342
        %v485 = vpop.permute.xlu0 %484
        %487 = vset.pattern.permute.xlu0 1
        %488 = vperm.xlu0 %487, %v343
        %v489 = vpop.permute.xlu0 %488
        %491 = vset.pattern.permute.xlu0 1
        %492 = vperm.xlu0 %491, %v344
        %v493 = vpop.permute.xlu0 %492
        %495 = vset.pattern.permute.xlu0 1
        %496 = vperm.xlu0 %495, %v345
        %v497 = vpop.permute.xlu0 %496
        %499 = vset.pattern.permute.xlu0 1
        %500 = vperm.xlu0 %499, %v346
        %v501 = vpop.permute.xlu0 %500
        %503 = vset.pattern.permute.xlu0 1
        %504 = vperm.xlu0 %503, %v347
        %v505 = vpop.permute.xlu0 %504
        %507 = vset.pattern.permute.xlu0 1
        %508 = vperm.xlu0 %507, %v348
        %v509 = vpop.permute.xlu0 %508
        %511 = vset.pattern.permute.xlu0 1
        %512 = vperm.xlu0 %511, %v349
        %v513 = vpop.permute.xlu0 %512
        %v515 = vlaneseq
        %v516 = vshrl.u32 %v515, 7
        %v517 = vsub.s32 1, %v516
        %v518 = vrot.slane %v350, %v517
        %v519 = vmul.f32 %v453, %v518
        %v520 = vmul.f32 %v457, %v518
        %v521 = vmul.f32 %v461, %v518
        %v522 = vmul.f32 %v465, %v518
        %v523 = vmul.f32 %v469, %v518
        %v524 = vmul.f32 %v473, %v518
        %v525 = vmul.f32 %v477, %v518
        %v526 = vmul.f32 %v481, %v518
        %v527 = vmul.f32 %v485, %v518
        %v528 = vmul.f32 %v489, %v518
        %v529 = vmul.f32 %v493, %v518
        %v530 = vmul.f32 %v497, %v518
        %v531 = vmul.f32 %v501, %v518
        %v532 = vmul.f32 %v505, %v518
        %v533 = vmul.f32 %v509, %v518
        %v534 = vmul.f32 %v513, %v518
        %v535 = vadd.f32 %v435, %v519
        %v536 = vadd.f32 %v436, %v520
        %v537 = vadd.f32 %v437, %v521
        %v538 = vadd.f32 %v438, %v522
        %v539 = vadd.f32 %v439, %v523
        %v540 = vadd.f32 %v440, %v524
        %v541 = vadd.f32 %v441, %v525
        %v542 = vadd.f32 %v442, %v526
        %v543 = vadd.f32 %v443, %v527
        %v544 = vadd.f32 %v444, %v528
        %v545 = vadd.f32 %v445, %v529
        %v546 = vadd.f32 %v446, %v530
        %v547 = vadd.f32 %v447, %v531
        %v548 = vadd.f32 %v448, %v532
        %v549 = vadd.f32 %v449, %v533
        %v550 = vadd.f32 %v450, %v534
        %v551 = vld [vmem:[%s2] sm:$0x1]
        %v553 = vlaneseq
        %v554 = vshrl.u32 %v553, 7
        %v555 = vsub.s32 0, %v554
        %v556 = vrot.slane %v551, %v555
        %v558 = vadd.f32 %v535, %v556
        %v559 = vadd.f32 %v536, %v556
        %v560 = vadd.f32 %v537, %v556
        %v561 = vadd.f32 %v538, %v556
        %v562 = vadd.f32 %v539, %v556
        %v563 = vadd.f32 %v540, %v556
        %v564 = vadd.f32 %v541, %v556
        %v565 = vadd.f32 %v542, %v556
        %v566 = vadd.f32 %v543, %v556
        %v567 = vadd.f32 %v544, %v556
        %v568 = vadd.f32 %v545, %v556
        %v569 = vadd.f32 %v546, %v556
        %v570 = vadd.f32 %v547, %v556
        %v571 = vadd.f32 %v548, %v556
        %v572 = vadd.f32 %v549, %v556
        %v573 = vadd.f32 %v550, %v556
        %v574 = vmax.f32 %v558, 0.0
        %v575 = vmax.f32 %v559, 0.0
        %v576 = vmax.f32 %v560, 0.0
        %v577 = vmax.f32 %v561, 0.0
        %v578 = vmax.f32 %v562, 0.0
        %v579 = vmax.f32 %v563, 0.0
        %v580 = vmax.f32 %v564, 0.0
        %v581 = vmax.f32 %v565, 0.0
        %v582 = vmax.f32 %v566, 0.0
        %v583 = vmax.f32 %v567, 0.0
        %v584 = vmax.f32 %v568, 0.0
        %v585 = vmax.f32 %v569, 0.0
        %v586 = vmax.f32 %v570, 0.0
        %v587 = vmax.f32 %v571, 0.0
        %v588 = vmax.f32 %v572, 0.0
        %v589 = vmax.f32 %v573, 0.0
        %v590 = vld [vmem:[%s3] sm:$0xff]
        %v591 = vld [vmem:[%s3 + $0x8] sm:$0xff]
        %v592 = vld [vmem:[%s3 + $0x10] sm:$0xff]
        %v593 = vld [vmem:[%s3 + $0x18] sm:$0xff]
        %v594 = vld [vmem:[%s3 + $0x20] sm:$0xff]
        %v595 = vld [vmem:[%s3 + $0x28] sm:$0xff]
        %v596 = vld [vmem:[%s3 + $0x30] sm:$0xff]
        %v597 = vld [vmem:[%s3 + $0x38] sm:$0xff]
        %v598 = vld [vmem:[%s3 + $0x40] sm:$0xff]
        %v599 = vld [vmem:[%s3 + $0x48] sm:$0xff]
        %v600 = vld [vmem:[%s3 + $0x50] sm:$0xff]
        %v601 = vld [vmem:[%s3 + $0x58] sm:$0xff]
        %v602 = vld [vmem:[%s3 + $0x60] sm:$0xff]
        %v603 = vld [vmem:[%s3 + $0x68] sm:$0xff]
        %v604 = vld [vmem:[%s3 + $0x70] sm:$0xff]
        %v605 = vld [vmem:[%s3 + $0x78] sm:$0xff]
        %v606 = vld [vmem:[%s4] sm:$0x1]
        %v608 = vlaneseq
        %v609 = vshrl.u32 %v608, 7
        %v610 = vsub.s32 0, %v609
        %v611 = vrot.slane %v606, %v610
        %613 = vmatprep.subr.mxu0 0.0
        %614 = vmatpush1.msra.mxu0 %v590
        %615 = vmatprep.subr.mxu0 0.0
        %616 = vmatpush1.msra.mxu0 %v591
        %617 = vmatprep.subr.mxu0 0.0
        %618 = vmatpush1.msra.mxu0 %v592
        %619 = vmatprep.subr.mxu0 0.0
        %620 = vmatpush1.msra.mxu0 %v593
        %621 = vmatprep.subr.mxu0 0.0
        %622 = vmatpush1.msra.mxu0 %v594
        %623 = vmatprep.subr.mxu0 0.0
        %624 = vmatpush1.msra.mxu0 %v595
        %625 = vmatprep.subr.mxu0 0.0
        %626 = vmatpush1.msra.mxu0 %v596
        %627 = vmatprep.subr.mxu0 0.0
        %628 = vmatpush1.msra.mxu0 %v597
        %629 = vmatprep.subr.mxu0 0.0
        %630 = vmatpush1.msra.mxu0 %v598
        %631 = vmatprep.subr.mxu0 0.0
        %632 = vmatpush1.msra.mxu0 %v599
        %633 = vmatprep.subr.mxu0 0.0
        %634 = vmatpush1.msra.mxu0 %v600
        %635 = vmatprep.subr.mxu0 0.0
        %636 = vmatpush1.msra.mxu0 %v601
        %637 = vmatprep.subr.mxu0 0.0
        %638 = vmatpush1.msra.mxu0 %v602
        %639 = vmatprep.subr.mxu0 0.0
        %640 = vmatpush1.msra.mxu0 %v603
        %641 = vmatprep.subr.mxu0 0.0
        %642 = vmatpush1.msra.mxu0 %v604
        %643 = vmatprep.subr.mxu0 0.0
        %644 = vmatpush1.msra.mxu0 %v605
        %645 = vmatprep.subr.mxu0 0.0
        %646 = vmatpush1.msra.mxu0 0.0
        %647 = vmatprep.subr.mxu0 0.0
        %648 = vmatpush1.msra.mxu0 0.0
        %649 = vmatprep.subr.mxu0 0.0
        %650 = vmatpush1.msra.mxu0 0.0
        %651 = vmatprep.subr.mxu0 0.0
        %652 = vmatpush1.msra.mxu0 0.0
        %653 = vmatprep.subr.mxu0 0.0
        %654 = vmatpush1.msra.mxu0 0.0
        %655 = vmatprep.subr.mxu0 0.0
        %656 = vmatpush1.msra.mxu0 0.0
        %657 = vmatprep.subr.mxu0 0.0
        %658 = vmatpush1.msra.mxu0 0.0
        %659 = vmatprep.subr.mxu0 0.0
        %660 = vmatpush1.msra.mxu0 0.0
        %661 = vmatprep.subr.mxu0 0.0
        %662 = vmatpush1.msra.mxu0 0.0
        %663 = vmatprep.subr.mxu0 0.0
        %664 = vmatpush1.msra.mxu0 0.0
        %665 = vmatprep.subr.mxu0 0.0
        %666 = vmatpush1.msra.mxu0 0.0
        %667 = vmatprep.subr.mxu0 0.0
        %668 = vmatpush1.msra.mxu0 0.0
        %669 = vmatprep.subr.mxu0 0.0
        %670 = vmatpush1.msra.mxu0 0.0
        %671 = vmatprep.subr.mxu0 0.0
        %672 = vmatpush1.msra.mxu0 0.0
        %673 = vmatprep.subr.mxu0 0.0
        %674 = vmatpush1.msra.mxu0 0.0
        %675 = vmatprep.subr.mxu0 0.0
        %676 = vmatpush1.msra.mxu0 0.0
        %677 = vmatprep.mubr.f32.mxu0 0.0
        %678 = vmatmul.mubr.f32.gmra.mrb[0].mxu0 %v574
        %v679 = vpop.f32.mrb[0].mxu0
        %v680 = vadd.f32 %v611, %v679
        %v681 = vpop.f32.mrb[0].mxu0
        %682 = vmatprep.mubr.f32.mxu0 0.0
        %683 = vmatmul.mubr.f32.gmra.mrb[0].mxu0 %v575
        %v684 = vpop.f32.mrb[0].mxu0
        %v685 = vadd.f32 %v611, %v684
        %v686 = vpop.f32.mrb[0].mxu0
        %687 = vmatprep.mubr.f32.mxu0 0.0
        %688 = vmatmul.mubr.f32.gmra.mrb[0].mxu0 %v576
        %v689 = vpop.f32.mrb[0].mxu0
        %v690 = vadd.f32 %v611, %v689
        %v691 = vpop.f32.mrb[0].mxu0
        %692 = vmatprep.mubr.f32.mxu0 0.0
        %693 = vmatmul.mubr.f32.gmra.mrb[0].mxu0 %v577
        %v694 = vpop.f32.mrb[0].mxu0
        %v695 = vadd.f32 %v611, %v694
        %v696 = vpop.f32.mrb[0].mxu0
        %697 = vmatprep.mubr.f32.mxu0 0.0
        %698 = vmatmul.mubr.f32.gmra.mrb[0].mxu0 %v578
        %v699 = vpop.f32.mrb[0].mxu0
        %v700 = vadd.f32 %v611, %v699
        %v701 = vpop.f32.mrb[0].mxu0
        %702 = vmatprep.mubr.f32.mxu0 0.0
        %703 = vmatmul.mubr.f32.gmra.mrb[0].mxu0 %v579
        %v704 = vpop.f32.mrb[0].mxu0
        %v705 = vadd.f32 %v611, %v704
        %v706 = vpop.f32.mrb[0].mxu0
        %707 = vmatprep.mubr.f32.mxu0 0.0
        %708 = vmatmul.mubr.f32.gmra.mrb[0].mxu0 %v580
        %v709 = vpop.f32.mrb[0].mxu0
        %v710 = vadd.f32 %v611, %v709
        %v711 = vpop.f32.mrb[0].mxu0
        %712 = vmatprep.mubr.f32.mxu0 0.0
        %713 = vmatmul.mubr.f32.gmra.mrb[0].mxu0 %v581
        %v714 = vpop.f32.mrb[0].mxu0
        %v715 = vadd.f32 %v611, %v714
        %v716 = vpop.f32.mrb[0].mxu0
        %717 = vmatprep.mubr.f32.mxu0 0.0
        %718 = vmatmul.mubr.f32.gmra.mrb[0].mxu0 %v582
        %v719 = vpop.f32.mrb[0].mxu0
        %v720 = vadd.f32 %v611, %v719
        %v721 = vpop.f32.mrb[0].mxu0
        %722 = vmatprep.mubr.f32.mxu0 0.0
        %723 = vmatmul.mubr.f32.gmra.mrb[0].mxu0 %v583
        %v724 = vpop.f32.mrb[0].mxu0
        %v725 = vadd.f32 %v611, %v724
        %v726 = vpop.f32.mrb[0].mxu0
        %727 = vmatprep.mubr.f32.mxu0 0.0
        %728 = vmatmul.mubr.f32.gmra.mrb[0].mxu0 %v584
        %v729 = vpop.f32.mrb[0].mxu0
        %v730 = vadd.f32 %v611, %v729
        %v731 = vpop.f32.mrb[0].mxu0
        %732 = vmatprep.mubr.f32.mxu0 0.0
        %733 = vmatmul.mubr.f32.gmra.mrb[0].mxu0 %v585
        %v734 = vpop.f32.mrb[0].mxu0
        %v735 = vadd.f32 %v611, %v734
        %v736 = vpop.f32.mrb[0].mxu0
        %737 = vmatprep.mubr.f32.mxu0 0.0
        %738 = vmatmul.mubr.f32.gmra.mrb[0].mxu0 %v586
        %v739 = vpop.f32.mrb[0].mxu0
        %v740 = vadd.f32 %v611, %v739
        %v741 = vpop.f32.mrb[0].mxu0
        %742 = vmatprep.mubr.f32.mxu0 0.0
        %743 = vmatmul.mubr.f32.gmra.mrb[0].mxu0 %v587
        %v744 = vpop.f32.mrb[0].mxu0
        %v745 = vadd.f32 %v611, %v744
        %v746 = vpop.f32.mrb[0].mxu0
        %747 = vmatprep.mubr.f32.mxu0 0.0
        %748 = vmatmul.mubr.f32.gmra.mrb[0].mxu0 %v588
        %v749 = vpop.f32.mrb[0].mxu0
        %v750 = vadd.f32 %v611, %v749
        %v751 = vpop.f32.mrb[0].mxu0
        %752 = vmatprep.mubr.f32.mxu0 0.0
        %753 = vmatmul.mubr.f32.gmra.mrb[0].mxu0 %v589
        %v754 = vpop.f32.mrb[0].mxu0
        %v755 = vadd.f32 %v611, %v754
        %v756 = vpop.f32.mrb[0].mxu0
        %757 = vdwg.mxu0
        %v758 = vmax.f32 %v680, 0.0
        %v759 = vmax.f32 %v685, 0.0
        %v760 = vmax.f32 %v690, 0.0
        %v761 = vmax.f32 %v695, 0.0
        %v762 = vmax.f32 %v700, 0.0
        %v763 = vmax.f32 %v705, 0.0
        %v764 = vmax.f32 %v710, 0.0
        %v765 = vmax.f32 %v715, 0.0
        %v766 = vmax.f32 %v720, 0.0
        %v767 = vmax.f32 %v725, 0.0
        %v768 = vmax.f32 %v730, 0.0
        %v769 = vmax.f32 %v735, 0.0
        %v770 = vmax.f32 %v740, 0.0
        %v771 = vmax.f32 %v745, 0.0
        %v772 = vmax.f32 %v750, 0.0
        %v773 = vmax.f32 %v755, 0.0
        %v774 = vld [vmem:[%s5] sm:$0xff]
        %v775 = vld [vmem:[%s5 + $0x8] sm:$0xff]
        %v776 = vld [vmem:[%s5 + $0x10] sm:$0xff]
        %v777 = vld [vmem:[%s5 + $0x18] sm:$0xff]
        %v778 = vld [vmem:[%s5 + $0x20] sm:$0xff]
        %v779 = vld [vmem:[%s5 + $0x28] sm:$0xff]
        %v780 = vld [vmem:[%s5 + $0x30] sm:$0xff]
        %v781 = vld [vmem:[%s5 + $0x38] sm:$0xff]
        %v782 = vld [vmem:[%s5 + $0x40] sm:$0xff]
        %v783 = vld [vmem:[%s5 + $0x48] sm:$0xff]
        %v784 = vld [vmem:[%s5 + $0x50] sm:$0xff]
        %v785 = vld [vmem:[%s5 + $0x58] sm:$0xff]
        %v786 = vld [vmem:[%s5 + $0x60] sm:$0xff]
        %v787 = vld [vmem:[%s5 + $0x68] sm:$0xff]
        %v788 = vld [vmem:[%s5 + $0x70] sm:$0xff]
        %v789 = vld [vmem:[%s5 + $0x78] sm:$0xff]
        %v790 = vld [vmem:[%s6] sm:$0x1]
        %v792 = vlaneseq
        %v793 = vshrl.u32 %v792, 7
        %v794 = vsub.s32 0, %v793
        %v795 = vrot.slane %v790, %v794
        %797 = vmatprep.subr.mxu0 0.0
        %798 = vmatpush1.msra.mxu0 %v774
        %799 = vmatprep.subr.mxu0 0.0
        %800 = vmatpush1.msra.mxu0 %v775
        %801 = vmatprep.subr.mxu0 0.0
        %802 = vmatpush1.msra.mxu0 %v776
        %803 = vmatprep.subr.mxu0 0.0
        %804 = vmatpush1.msra.mxu0 %v777
        %805 = vmatprep.subr.mxu0 0.0
        %806 = vmatpush1.msra.mxu0 %v778
        %807 = vmatprep.subr.mxu0 0.0
        %808 = vmatpush1.msra.mxu0 %v779
        %809 = vmatprep.subr.mxu0 0.0
        %810 = vmatpush1.msra.mxu0 %v780
        %811 = vmatprep.subr.mxu0 0.0
        %812 = vmatpush1.msra.mxu0 %v781
        %813 = vmatprep.subr.mxu0 0.0
        %814 = vmatpush1.msra.mxu0 %v782
        %815 = vmatprep.subr.mxu0 0.0
        %816 = vmatpush1.msra.mxu0 %v783
        %817 = vmatprep.subr.mxu0 0.0
        %818 = vmatpush1.msra.mxu0 %v784
        %819 = vmatprep.subr.mxu0 0.0
        %820 = vmatpush1.msra.mxu0 %v785
        %821 = vmatprep.subr.mxu0 0.0
        %822 = vmatpush1.msra.mxu0 %v786
        %823 = vmatprep.subr.mxu0 0.0
        %824 = vmatpush1.msra.mxu0 %v787
        %825 = vmatprep.subr.mxu0 0.0
        %826 = vmatpush1.msra.mxu0 %v788
        %827 = vmatprep.subr.mxu0 0.0
        %828 = vmatpush1.msra.mxu0 %v789
        %829 = vmatprep.subr.mxu0 0.0
        %830 = vmatpush1.msra.mxu0 0.0
        %831 = vmatprep.subr.mxu0 0.0
        %832 = vmatpush1.msra.mxu0 0.0
        %833 = vmatprep.subr.mxu0 0.0
        %834 = vmatpush1.msra.mxu0 0.0
        %835 = vmatprep.subr.mxu0 0.0
        %836 = vmatpush1.msra.mxu0 0.0
        %837 = vmatprep.subr.mxu0 0.0
        %838 = vmatpush1.msra.mxu0 0.0
        %839 = vmatprep.subr.mxu0 0.0
        %840 = vmatpush1.msra.mxu0 0.0
        %841 = vmatprep.subr.mxu0 0.0
        %842 = vmatpush1.msra.mxu0 0.0
        %843 = vmatprep.subr.mxu0 0.0
        %844 = vmatpush1.msra.mxu0 0.0
        %845 = vmatprep.subr.mxu0 0.0
        %846 = vmatpush1.msra.mxu0 0.0
        %847 = vmatprep.subr.mxu0 0.0
        %848 = vmatpush1.msra.mxu0 0.0
        %849 = vmatprep.subr.mxu0 0.0
        %850 = vmatpush1.msra.mxu0 0.0
        %851 = vmatprep.subr.mxu0 0.0
        %852 = vmatpush1.msra.mxu0 0.0
        %853 = vmatprep.subr.mxu0 0.0
        %854 = vmatpush1.msra.mxu0 0.0
        %855 = vmatprep.subr.mxu0 0.0
        %856 = vmatpush1.msra.mxu0 0.0
        %857 = vmatprep.subr.mxu0 0.0
        %858 = vmatpush1.msra.mxu0 0.0
        %859 = vmatprep.subr.mxu0 0.0
        %860 = vmatpush1.msra.mxu0 0.0
        %861 = vmatprep.mubr.f32.mxu0 0.0
        %862 = vmatmul.mubr.f32.gmra.mrb[0].mxu0 %v758
        %v863 = vpop.f32.mrb[0].mxu0
        %v864 = vadd.f32 %v795, %v863
        %v865 = vpop.f32.mrb[0].mxu0
        %866 = vmatprep.mubr.f32.mxu0 0.0
        %867 = vmatmul.mubr.f32.gmra.mrb[0].mxu0 %v759
        %v868 = vpop.f32.mrb[0].mxu0
        %v869 = vadd.f32 %v795, %v868
        %v870 = vpop.f32.mrb[0].mxu0
        %871 = vmatprep.mubr.f32.mxu0 0.0
        %872 = vmatmul.mubr.f32.gmra.mrb[0].mxu0 %v760
        %v873 = vpop.f32.mrb[0].mxu0
        %v874 = vadd.f32 %v795, %v873
        %v875 = vpop.f32.mrb[0].mxu0
        %876 = vmatprep.mubr.f32.mxu0 0.0
        %877 = vmatmul.mubr.f32.gmra.mrb[0].mxu0 %v761
        %v878 = vpop.f32.mrb[0].mxu0
        %v879 = vadd.f32 %v795, %v878
        %v880 = vpop.f32.mrb[0].mxu0
        %881 = vmatprep.mubr.f32.mxu0 0.0
        %882 = vmatmul.mubr.f32.gmra.mrb[0].mxu0 %v762
        %v883 = vpop.f32.mrb[0].mxu0
        %v884 = vadd.f32 %v795, %v883
        %v885 = vpop.f32.mrb[0].mxu0
        %886 = vmatprep.mubr.f32.mxu0 0.0
        %887 = vmatmul.mubr.f32.gmra.mrb[0].mxu0 %v763
        %v888 = vpop.f32.mrb[0].mxu0
        %v889 = vadd.f32 %v795, %v888
        %v890 = vpop.f32.mrb[0].mxu0
        %891 = vmatprep.mubr.f32.mxu0 0.0
        %892 = vmatmul.mubr.f32.gmra.mrb[0].mxu0 %v764
        %v893 = vpop.f32.mrb[0].mxu0
        %v894 = vadd.f32 %v795, %v893
        %v895 = vpop.f32.mrb[0].mxu0
        %896 = vmatprep.mubr.f32.mxu0 0.0
        %897 = vmatmul.mubr.f32.gmra.mrb[0].mxu0 %v765
        %v898 = vpop.f32.mrb[0].mxu0
        %v899 = vadd.f32 %v795, %v898
        %v900 = vpop.f32.mrb[0].mxu0
        %901 = vmatprep.mubr.f32.mxu0 0.0
        %902 = vmatmul.mubr.f32.gmra.mrb[0].mxu0 %v766
        %v903 = vpop.f32.mrb[0].mxu0
        %v904 = vadd.f32 %v795, %v903
        %v905 = vpop.f32.mrb[0].mxu0
        %906 = vmatprep.mubr.f32.mxu0 0.0
        %907 = vmatmul.mubr.f32.gmra.mrb[0].mxu0 %v767
        %v908 = vpop.f32.mrb[0].mxu0
        %v909 = vadd.f32 %v795, %v908
        %v910 = vpop.f32.mrb[0].mxu0
        %911 = vmatprep.mubr.f32.mxu0 0.0
        %912 = vmatmul.mubr.f32.gmra.mrb[0].mxu0 %v768
        %v913 = vpop.f32.mrb[0].mxu0
        %v914 = vadd.f32 %v795, %v913
        %v915 = vpop.f32.mrb[0].mxu0
        %916 = vmatprep.mubr.f32.mxu0 0.0
        %917 = vmatmul.mubr.f32.gmra.mrb[0].mxu0 %v769
        %v918 = vpop.f32.mrb[0].mxu0
        %v919 = vadd.f32 %v795, %v918
        %v920 = vpop.f32.mrb[0].mxu0
        %921 = vmatprep.mubr.f32.mxu0 0.0
        %922 = vmatmul.mubr.f32.gmra.mrb[0].mxu0 %v770
        %v923 = vpop.f32.mrb[0].mxu0
        %v924 = vadd.f32 %v795, %v923
        %v925 = vpop.f32.mrb[0].mxu0
        %926 = vmatprep.mubr.f32.mxu0 0.0
        %927 = vmatmul.mubr.f32.gmra.mrb[0].mxu0 %v771
        %v928 = vpop.f32.mrb[0].mxu0
        %v929 = vadd.f32 %v795, %v928
        %v930 = vpop.f32.mrb[0].mxu0
        %931 = vmatprep.mubr.f32.mxu0 0.0
        %932 = vmatmul.mubr.f32.gmra.mrb[0].mxu0 %v772
        %v933 = vpop.f32.mrb[0].mxu0
        %v934 = vadd.f32 %v795, %v933
        %v935 = vpop.f32.mrb[0].mxu0
        %936 = vmatprep.mubr.f32.mxu0 0.0
        %937 = vmatmul.mubr.f32.gmra.mrb[0].mxu0 %v773
        %v938 = vpop.f32.mrb[0].mxu0
        %v939 = vadd.f32 %v795, %v938
        %v940 = vpop.f32.mrb[0].mxu0
        %941 = vdwg.mxu0
        %v942 = vmax.f32 %v864, 0.0
        %v943 = vmax.f32 %v869, 0.0
        %v944 = vmax.f32 %v874, 0.0
        %v945 = vmax.f32 %v879, 0.0
        %v946 = vmax.f32 %v884, 0.0
        %v947 = vmax.f32 %v889, 0.0
        %v948 = vmax.f32 %v894, 0.0
        %v949 = vmax.f32 %v899, 0.0
        %v950 = vmax.f32 %v904, 0.0
        %v951 = vmax.f32 %v909, 0.0
        %v952 = vmax.f32 %v914, 0.0
        %v953 = vmax.f32 %v919, 0.0
        %v954 = vmax.f32 %v924, 0.0
        %v955 = vmax.f32 %v929, 0.0
        %v956 = vmax.f32 %v934, 0.0
        %v957 = vmax.f32 %v939, 0.0
        %v958 = vld [vmem:[%s7] sm:$0xff]
        %v959 = vld [vmem:[%s7 + $0x8] sm:$0xff]
        %v960 = vld [vmem:[%s7 + $0x10] sm:$0xff]
        %v961 = vld [vmem:[%s7 + $0x18] sm:$0xff]
        %v962 = vld [vmem:[%s7 + $0x20] sm:$0xff]
        %v963 = vld [vmem:[%s7 + $0x28] sm:$0xff]
        %v964 = vld [vmem:[%s7 + $0x30] sm:$0xff]
        %v965 = vld [vmem:[%s7 + $0x38] sm:$0xff]
        %v966 = vld [vmem:[%s7 + $0x40] sm:$0xff]
        %v967 = vld [vmem:[%s7 + $0x48] sm:$0xff]
        %v968 = vld [vmem:[%s7 + $0x50] sm:$0xff]
        %v969 = vld [vmem:[%s7 + $0x58] sm:$0xff]
        %v970 = vld [vmem:[%s7 + $0x60] sm:$0xff]
        %v971 = vld [vmem:[%s7 + $0x68] sm:$0xff]
        %v972 = vld [vmem:[%s7 + $0x70] sm:$0xff]
        %v973 = vld [vmem:[%s7 + $0x78] sm:$0xff]
        %974 = vmatprep.subr.mxu0 0.0
        %975 = vmatpush1.msra.mxu0 %v958
        %976 = vmatprep.subr.mxu0 0.0
        %977 = vmatpush1.msra.mxu0 %v959
        %978 = vmatprep.subr.mxu0 0.0
        %979 = vmatpush1.msra.mxu0 %v960
        %980 = vmatprep.subr.mxu0 0.0
        %981 = vmatpush1.msra.mxu0 %v961
        %982 = vmatprep.subr.mxu0 0.0
        %983 = vmatpush1.msra.mxu0 %v962
        %984 = vmatprep.subr.mxu0 0.0
        %985 = vmatpush1.msra.mxu0 %v963
        %986 = vmatprep.subr.mxu0 0.0
        %987 = vmatpush1.msra.mxu0 %v964
        %988 = vmatprep.subr.mxu0 0.0
        %989 = vmatpush1.msra.mxu0 %v965
        %990 = vmatprep.subr.mxu0 0.0
        %991 = vmatpush1.msra.mxu0 %v966
        %992 = vmatprep.subr.mxu0 0.0
        %993 = vmatpush1.msra.mxu0 %v967
        %994 = vmatprep.subr.mxu0 0.0
        %995 = vmatpush1.msra.mxu0 %v968
        %996 = vmatprep.subr.mxu0 0.0
        %997 = vmatpush1.msra.mxu0 %v969
        %998 = vmatprep.subr.mxu0 0.0
        %999 = vmatpush1.msra.mxu0 %v970
        %1000 = vmatprep.subr.mxu0 0.0
        %1001 = vmatpush1.msra.mxu0 %v971
        %1002 = vmatprep.subr.mxu0 0.0
        %1003 = vmatpush1.msra.mxu0 %v972
        %1004 = vmatprep.subr.mxu0 0.0
        %1005 = vmatpush1.msra.mxu0 %v973
        %1006 = vmatprep.subr.mxu0 0.0
        %1007 = vmatpush1.msra.mxu0 0.0
        %1008 = vmatprep.subr.mxu0 0.0
        %1009 = vmatpush1.msra.mxu0 0.0
        %1010 = vmatprep.subr.mxu0 0.0
        %1011 = vmatpush1.msra.mxu0 0.0
        %1012 = vmatprep.subr.mxu0 0.0
        %1013 = vmatpush1.msra.mxu0 0.0
        %1014 = vmatprep.subr.mxu0 0.0
        %1015 = vmatpush1.msra.mxu0 0.0
        %1016 = vmatprep.subr.mxu0 0.0
        %1017 = vmatpush1.msra.mxu0 0.0
        %1018 = vmatprep.subr.mxu0 0.0
        %1019 = vmatpush1.msra.mxu0 0.0
        %1020 = vmatprep.subr.mxu0 0.0
        %1021 = vmatpush1.msra.mxu0 0.0
        %1022 = vmatprep.subr.mxu0 0.0
        %1023 = vmatpush1.msra.mxu0 0.0
        %1024 = vmatprep.subr.mxu0 0.0
        %1025 = vmatpush1.msra.mxu0 0.0
        %1026 = vmatprep.subr.mxu0 0.0
        %1027 = vmatpush1.msra.mxu0 0.0
        %1028 = vmatprep.subr.mxu0 0.0
        %1029 = vmatpush1.msra.mxu0 0.0
        %1030 = vmatprep.subr.mxu0 0.0
        %1031 = vmatpush1.msra.mxu0 0.0
        %1032 = vmatprep.subr.mxu0 0.0
        %1033 = vmatpush1.msra.mxu0 0.0
        %1034 = vmatprep.subr.mxu0 0.0
        %1035 = vmatpush1.msra.mxu0 0.0
        %1036 = vmatprep.subr.mxu0 0.0
        %1037 = vmatpush1.msra.mxu0 0.0
        %1038 = vmatprep.mubr.f32.mxu0 0.0
        %1039 = vmatmul.mubr.f32.gmra.mrb[0].mxu0 %v942
        %v1040 = vpop.f32.mrb[0].mxu0
        %v1041 = vadd.f32 0.0, %v1040
        %v1042 = vpop.f32.mrb[0].mxu0
        %1043 = vmatprep.mubr.f32.mxu0 0.0
        %1044 = vmatmul.mubr.f32.gmra.mrb[0].mxu0 %v943
        %v1045 = vpop.f32.mrb[0].mxu0
        %v1046 = vadd.f32 0.0, %v1045
        %v1047 = vpop.f32.mrb[0].mxu0
        %1048 = vmatprep.mubr.f32.mxu0 0.0
        %1049 = vmatmul.mubr.f32.gmra.mrb[0].mxu0 %v944
        %v1050 = vpop.f32.mrb[0].mxu0
        %v1051 = vadd.f32 0.0, %v1050
        %v1052 = vpop.f32.mrb[0].mxu0
        %1053 = vmatprep.mubr.f32.mxu0 0.0
        %1054 = vmatmul.mubr.f32.gmra.mrb[0].mxu0 %v945
        %v1055 = vpop.f32.mrb[0].mxu0
        %v1056 = vadd.f32 0.0, %v1055
        %v1057 = vpop.f32.mrb[0].mxu0
        %1058 = vmatprep.mubr.f32.mxu0 0.0
        %1059 = vmatmul.mubr.f32.gmra.mrb[0].mxu0 %v946
        %v1060 = vpop.f32.mrb[0].mxu0
        %v1061 = vadd.f32 0.0, %v1060
        %v1062 = vpop.f32.mrb[0].mxu0
        %1063 = vmatprep.mubr.f32.mxu0 0.0
        %1064 = vmatmul.mubr.f32.gmra.mrb[0].mxu0 %v947
        %v1065 = vpop.f32.mrb[0].mxu0
        %v1066 = vadd.f32 0.0, %v1065
        %v1067 = vpop.f32.mrb[0].mxu0
        %1068 = vmatprep.mubr.f32.mxu0 0.0
        %1069 = vmatmul.mubr.f32.gmra.mrb[0].mxu0 %v948
        %v1070 = vpop.f32.mrb[0].mxu0
        %v1071 = vadd.f32 0.0, %v1070
        %v1072 = vpop.f32.mrb[0].mxu0
        %1073 = vmatprep.mubr.f32.mxu0 0.0
        %1074 = vmatmul.mubr.f32.gmra.mrb[0].mxu0 %v949
        %v1075 = vpop.f32.mrb[0].mxu0
        %v1076 = vadd.f32 0.0, %v1075
        %v1077 = vpop.f32.mrb[0].mxu0
        %1078 = vmatprep.mubr.f32.mxu0 0.0
        %1079 = vmatmul.mubr.f32.gmra.mrb[0].mxu0 %v950
        %v1080 = vpop.f32.mrb[0].mxu0
        %v1081 = vadd.f32 0.0, %v1080
        %v1082 = vpop.f32.mrb[0].mxu0
        %1083 = vmatprep.mubr.f32.mxu0 0.0
        %1084 = vmatmul.mubr.f32.gmra.mrb[0].mxu0 %v951
        %v1085 = vpop.f32.mrb[0].mxu0
        %v1086 = vadd.f32 0.0, %v1085
        %v1087 = vpop.f32.mrb[0].mxu0
        %1088 = vmatprep.mubr.f32.mxu0 0.0
        %1089 = vmatmul.mubr.f32.gmra.mrb[0].mxu0 %v952
        %v1090 = vpop.f32.mrb[0].mxu0
        %v1091 = vadd.f32 0.0, %v1090
        %v1092 = vpop.f32.mrb[0].mxu0
        %1093 = vmatprep.mubr.f32.mxu0 0.0
        %1094 = vmatmul.mubr.f32.gmra.mrb[0].mxu0 %v953
        %v1095 = vpop.f32.mrb[0].mxu0
        %v1096 = vadd.f32 0.0, %v1095
        %v1097 = vpop.f32.mrb[0].mxu0
        %1098 = vmatprep.mubr.f32.mxu0 0.0
        %1099 = vmatmul.mubr.f32.gmra.mrb[0].mxu0 %v954
        %v1100 = vpop.f32.mrb[0].mxu0
        %v1101 = vadd.f32 0.0, %v1100
        %v1102 = vpop.f32.mrb[0].mxu0
        %1103 = vmatprep.mubr.f32.mxu0 0.0
        %1104 = vmatmul.mubr.f32.gmra.mrb[0].mxu0 %v955
        %v1105 = vpop.f32.mrb[0].mxu0
        %v1106 = vadd.f32 0.0, %v1105
        %v1107 = vpop.f32.mrb[0].mxu0
        %1108 = vmatprep.mubr.f32.mxu0 0.0
        %1109 = vmatmul.mubr.f32.gmra.mrb[0].mxu0 %v956
        %v1110 = vpop.f32.mrb[0].mxu0
        %v1111 = vadd.f32 0.0, %v1110
        %v1112 = vpop.f32.mrb[0].mxu0
        %1113 = vmatprep.mubr.f32.mxu0 0.0
        %1114 = vmatmul.mubr.f32.gmra.mrb[0].mxu0 %v957
        %v1115 = vpop.f32.mrb[0].mxu0
        %v1116 = vadd.f32 0.0, %v1115
        %v1117 = vpop.f32.mrb[0].mxu0
        %1118 = vdwg.mxu0
        %v1119 = vld [vmem:[#allocation2] sm:$0x1]
        %v1121 = vlaneseq
        %v1122 = vshrl.u32 %v1121, 7
        %v1123 = vsub.s32 0, %v1122
        %v1124 = vrot.slane %v1119, %v1123
        %v1126 = vadd.f32 %v1041, %v1124
        %v1127 = vadd.f32 %v1046, %v1124
        %v1128 = vadd.f32 %v1051, %v1124
        %v1129 = vadd.f32 %v1056, %v1124
        %v1130 = vadd.f32 %v1061, %v1124
        %v1131 = vadd.f32 %v1066, %v1124
        %v1132 = vadd.f32 %v1071, %v1124
        %v1133 = vadd.f32 %v1076, %v1124
        %v1134 = vadd.f32 %v1081, %v1124
        %v1135 = vadd.f32 %v1086, %v1124
        %v1136 = vadd.f32 %v1091, %v1124
        %v1137 = vadd.f32 %v1096, %v1124
        %v1138 = vadd.f32 %v1101, %v1124
        %v1139 = vadd.f32 %v1106, %v1124
        %v1140 = vadd.f32 %v1111, %v1124
        %v1141 = vadd.f32 %v1116, %v1124
        %1158 = vset.pattern.permute.xlu0 0
        %1159 = vperm.xlu0 %1158, %v1126
        %v1160 = vpop.permute.xlu0 %1159
        %1161 = vset.pattern.permute.xlu0 0
        %1162 = vperm.xlu0 %1161, %v1127
        %v1163 = vpop.permute.xlu0 %1162
        %1164 = vset.pattern.permute.xlu0 0
        %1165 = vperm.xlu0 %1164, %v1128
        %v1166 = vpop.permute.xlu0 %1165
        %1167 = vset.pattern.permute.xlu0 0
        %1168 = vperm.xlu0 %1167, %v1129
        %v1169 = vpop.permute.xlu0 %1168
        %1170 = vset.pattern.permute.xlu0 0
        %1171 = vperm.xlu0 %1170, %v1130
        %v1172 = vpop.permute.xlu0 %1171
        %1173 = vset.pattern.permute.xlu0 0
        %1174 = vperm.xlu0 %1173, %v1131
        %v1175 = vpop.permute.xlu0 %1174
        %1176 = vset.pattern.permute.xlu0 0
        %1177 = vperm.xlu0 %1176, %v1132
        %v1178 = vpop.permute.xlu0 %1177
        %1179 = vset.pattern.permute.xlu0 0
        %1180 = vperm.xlu0 %1179, %v1133
        %v1181 = vpop.permute.xlu0 %1180
        %1182 = vset.pattern.permute.xlu0 0
        %1183 = vperm.xlu0 %1182, %v1134
        %v1184 = vpop.permute.xlu0 %1183
        %1185 = vset.pattern.permute.xlu0 0
        %1186 = vperm.xlu0 %1185, %v1135
        %v1187 = vpop.permute.xlu0 %1186
        %1188 = vset.pattern.permute.xlu0 0
        %1189 = vperm.xlu0 %1188, %v1136
        %v1190 = vpop.permute.xlu0 %1189
        %1191 = vset.pattern.permute.xlu0 0
        %1192 = vperm.xlu0 %1191, %v1137
        %v1193 = vpop.permute.xlu0 %1192
        %1194 = vset.pattern.permute.xlu0 0
        %1195 = vperm.xlu0 %1194, %v1138
        %v1196 = vpop.permute.xlu0 %1195
        %1197 = vset.pattern.permute.xlu0 0
        %1198 = vperm.xlu0 %1197, %v1139
        %v1199 = vpop.permute.xlu0 %1198
        %1200 = vset.pattern.permute.xlu0 0
        %1201 = vperm.xlu0 %1200, %v1140
        %v1202 = vpop.permute.xlu0 %1201
        %1203 = vset.pattern.permute.xlu0 0
        %1204 = vperm.xlu0 %1203, %v1141
        %v1205 = vpop.permute.xlu0 %1204
        %v1206 = vlaneseq
        %v1207 = vand.u32 %v1206, 127
        %v1208 = vlaneseq
        %v1209 = vshrl.u32 %v1208, 7
        %v1210 = vsub.s32 %v1207, %v1209
        %v1211 = vrot.slane %v1160, %v1210
        %v1212 = vadd.s32 %v1207, 4294967288
        %v1213 = vlaneseq
        %v1214 = vshrl.u32 %v1213, 7
        %v1215 = vsub.s32 %v1212, %v1214
        %v1216 = vrot.slane %v1163, %v1215
        %vm1217 = vcmask 130112
        %v1218 = vsel %vm1217, %v1216, %v1211
        %v1219 = vadd.s32 %v1207, 4294967280
        %v1220 = vlaneseq
        %v1221 = vshrl.u32 %v1220, 7
        %v1222 = vsub.s32 %v1219, %v1221
        %v1223 = vrot.slane %v1166, %v1222
        %vm1224 = vcmask 195712
        %v1225 = vsel %vm1224, %v1223, %v1218
        %v1226 = vadd.s32 %v1207, 4294967272
        %v1227 = vlaneseq
        %v1228 = vshrl.u32 %v1227, 7
        %v1229 = vsub.s32 %v1226, %v1228
        %v1230 = vrot.slane %v1169, %v1229
        %vm1231 = vcmask 261312
        %v1232 = vsel %vm1231, %v1230, %v1225
        %v1233 = vadd.s32 %v1207, 4294967264
        %v1234 = vlaneseq
        %v1235 = vshrl.u32 %v1234, 7
        %v1236 = vsub.s32 %v1233, %v1235
        %v1237 = vrot.slane %v1172, %v1236
        %vm1238 = vcmask 326912
        %v1239 = vsel %vm1238, %v1237, %v1232
        %v1240 = vadd.s32 %v1207, 4294967256
        %v1241 = vlaneseq
        %v1242 = vshrl.u32 %v1241, 7
        %v1243 = vsub.s32 %v1240, %v1242
        %v1244 = vrot.slane %v1175, %v1243
        %vm1245 = vcmask 392512
        %v1246 = vsel %vm1245, %v1244, %v1239
        %v1247 = vadd.s32 %v1207, 4294967248
        %v1248 = vlaneseq
        %v1249 = vshrl.u32 %v1248, 7
        %v1250 = vsub.s32 %v1247, %v1249
        %v1251 = vrot.slane %v1178, %v1250
        %vm1252 = vcmask 458112
        %v1253 = vsel %vm1252, %v1251, %v1246
        %v1254 = vadd.s32 %v1207, 4294967240
        %v1255 = vlaneseq
        %v1256 = vshrl.u32 %v1255, 7
        %v1257 = vsub.s32 %v1254, %v1256
        %v1258 = vrot.slane %v1181, %v1257
        %vm1259 = vcmask 523712
        %v1260 = vsel %vm1259, %v1258, %v1253
        %v1261 = vadd.s32 %v1207, 4294967232
        %v1262 = vlaneseq
        %v1263 = vshrl.u32 %v1262, 7
        %v1264 = vsub.s32 %v1261, %v1263
        %v1265 = vrot.slane %v1184, %v1264
        %vm1266 = vcmask 589312
        %v1267 = vsel %vm1266, %v1265, %v1260
        %v1268 = vadd.s32 %v1207, 4294967224
        %v1269 = vlaneseq
        %v1270 = vshrl.u32 %v1269, 7
        %v1271 = vsub.s32 %v1268, %v1270
        %v1272 = vrot.slane %v1187, %v1271
        %vm1273 = vcmask 654912
        %v1274 = vsel %vm1273, %v1272, %v1267
        %v1275 = vadd.s32 %v1207, 4294967216
        %v1276 = vlaneseq
        %v1277 = vshrl.u32 %v1276, 7
        %v1278 = vsub.s32 %v1275, %v1277
        %v1279 = vrot.slane %v1190, %v1278
        %vm1280 = vcmask 720512
        %v1281 = vsel %vm1280, %v1279, %v1274
        %v1282 = vadd.s32 %v1207, 4294967208
        %v1283 = vlaneseq
        %v1284 = vshrl.u32 %v1283, 7
        %v1285 = vsub.s32 %v1282, %v1284
        %v1286 = vrot.slane %v1193, %v1285
        %vm1287 = vcmask 786112
        %v1288 = vsel %vm1287, %v1286, %v1281
        %v1289 = vadd.s32 %v1207, 4294967200
        %v1290 = vlaneseq
        %v1291 = vshrl.u32 %v1290, 7
        %v1292 = vsub.s32 %v1289, %v1291
        %v1293 = vrot.slane %v1196, %v1292
        %vm1294 = vcmask 851712
        %v1295 = vsel %vm1294, %v1293, %v1288
        %v1296 = vadd.s32 %v1207, 4294967192
        %v1297 = vlaneseq
        %v1298 = vshrl.u32 %v1297, 7
        %v1299 = vsub.s32 %v1296, %v1298
        %v1300 = vrot.slane %v1199, %v1299
        %vm1301 = vcmask 917312
        %v1302 = vsel %vm1301, %v1300, %v1295
        %v1303 = vadd.s32 %v1207, 4294967184
        %v1304 = vlaneseq
        %v1305 = vshrl.u32 %v1304, 7
        %v1306 = vsub.s32 %v1303, %v1305
        %v1307 = vrot.slane %v1202, %v1306
        %vm1308 = vcmask 982912
        %v1309 = vsel %vm1308, %v1307, %v1302
        %v1310 = vadd.s32 %v1207, 4294967176
        %v1311 = vlaneseq
        %v1312 = vshrl.u32 %v1311, 7
        %v1313 = vsub.s32 %v1310, %v1312
        %v1314 = vrot.slane %v1205, %v1313
        %vm1315 = vcmask 1048512
        %v1316 = vsel %vm1315, %v1314, %v1309
        %1318 = vst [vmem:[%s327] sm:$0x1] %v1316
        %s1319 = sand.u32 %s227, 1
        %s1320 = scalar_lea.sflag [#allocation4], %s1319
        %s1321 = sand.u32 %s227, 1
        %s1322 = scalar_lea.vmem [#allocation3], %s1321
        // Predicated region
        $region57: #{tpu_custom_call.1} parent=55 // pred_check
          %p1323 = pneg %p237
        $region58: #{tpu_custom_call.1} parent=55 // pred_check_branch
          %1325 = sbr.rel (%p1323) target = $region60
        $region59: #{tpu_custom_call.1} parent=55 // pred_region
          %s1327 = ssub.s32 16, 16
          %1328 = vsyncadd %s1320, %s1327
          %s1329 = smul.addr %s25, 16
          %s1330 = scalar_lea.hbm %s9, %s1329
          %s1332 = sshll.u32 %s1322, 4
          %s1333 = int_to_ptr.vmem [resolvable:$true] %s1332
          %1335 = dma.vmem_to_hbm [thread:$0]  %s1333, 16, %s1330, %s1320
        $region60: #{tpu_custom_call.1} parent=55 // pred_fallthru
          _
      $region56: #{tpu_custom_call.1} parent=5 // pred_fallthru
        _
      %p1336 = scmp.le.s32.totalorder 2, %s20
      // Predicated region
      $region61: #{tpu_custom_call.1} parent=5 // pred_check
        %p1337 = pneg %p1336
      $region62: #{tpu_custom_call.1} parent=5 // pred_check_branch
        %1339 = sbr.rel (%p1337) target = $region64
      $region63: #{tpu_custom_call.1} parent=5 // pred_region
        %s1340 = ssub.s32 %s20, 2
        // Predicated region
        $region65: #{tpu_custom_call.1} parent=63 // pred_check
          %p1341 = pneg %p243
        $region66: #{tpu_custom_call.1} parent=63 // pred_check_branch
          %1343 = sbr.rel (%p1341) target = $region68
        $region67: #{tpu_custom_call.1} parent=63 // pred_region
          %s1344 = sand.u32 %s228, 1
          %s1345 = scalar_lea.sflag [#allocation4], %s1344
          %s1346 = sand.u32 %s228, 1
          %s1347 = scalar_lea.vmem [#allocation3], %s1346
          %1348 = dma.done %s1345, 16
        $region68: #{tpu_custom_call.1} parent=63 // pred_fallthru
          _
      $region64: #{tpu_custom_call.1} parent=5 // pred_fallthru
        _
    $region6: #{tpu_custom_call.1} parent=1 // loop_footer
      %s24 = sadd.s32 1, %s20
    $region7: #{tpu_custom_call.1} parent=1 // loop_footer_branch
      %19 = sbr.rel target = $region3
    $region8: #{tpu_custom_call.1} parent=1 // loop_exit
      _
    %1349 = vsyncpa [#allocation4], 1
    %s1350 = scalar_lea.sflag [#allocation4], 1
    %1351 = vsyncpa %s1350, 1

</llo_original>
